<compile_context>
chip_gen: v7x
topology: tpu7x:2x2x1
jax: 0.10.0
libtpu: 0.0.40
codegen_flags: <defaults>
</compile_context>

<pallas_src>
import math

import jax
import jax.numpy as jnp
from jax.experimental import pallas as pl
from jax.experimental.pallas import tpu as pltpu


def _round_up(x: int, m: int) -> int:
    return ((x + m - 1) // m) * m


def _choose_tile(E, F, b_pad, itemsize, tile_e):
    """Edge-tile size: lane-friendly multiple of 128, VMEM-budgeted."""
    # Double-buffered edge-feature stream under ~12 MiB.
    cap_stream = max(128, ((12 * 2**20) // (2 * F * itemsize)) // 128 * 128)
    # In-register [b_pad, te] weighted one-hot under ~2 MiB (large-B guard).
    cap_onehot = max(128, ((2 * 2**20) // (4 * b_pad)) // 128 * 128)
    te = min(int(tile_e), cap_stream, cap_onehot)
    full = _round_up(max(E, 1), 8)
    if te >= full:            # tiny input: a single tile covering everything
        te = full
    return te


def edge_weight_and_sum_v2(edge_feats, lin_w, lin_b, seg_ids, num_graphs,
                           *, tile_e: int = 2048, n_cores: int = 1):
    """EdgeWeightAndSum_V2 forward.

    Args:
      edge_feats: [E, F] float (f32 or bf16) edge features of the batched graph.
      lin_w:      [1, F] nn.Linear(in_feats, 1) weight (PyTorch layout).
      lin_b:      [1]    bias.
      seg_ids:    [E]    int32 graph id per edge; ids outside [0, B) are
                         silently dropped from h_g_sum (one-hot semantics).
      num_graphs: B (static).
      tile_e:     max edge-tile size (multiple of 128 recommended).
      n_cores:    edge-axis split across TensorCores.  Keep 1 on single-TC
                  chips (v5e/v6e); set 2 on v7x megacore.

    Returns:
      (h_g_sum [B, F], weights [E, 1]) in edge_feats.dtype.
    """
    E, F = edge_feats.shape
    B = int(num_graphs)
    dt = edge_feats.dtype
    itemsize = jnp.dtype(dt).itemsize
    b_pad = _round_up(max(B, 1), 8)

    te = _choose_tile(E, F, b_pad, itemsize, tile_e)
    tiles_needed = -(-max(E, 1) // te)
    tiles_per_core = -(-tiles_needed // n_cores)
    n_tiles = n_cores * tiles_per_core
    e_pad = n_tiles * te

    # ---- host-side prep (seg / weight tensors are tiny; lane-dense layout) --
    w_row = jnp.asarray(lin_w).reshape(1, F).astype(dt)
    bias = jnp.asarray(lin_b, jnp.float32).reshape(1, 1)
    sid = jnp.pad(jnp.asarray(seg_ids, jnp.int32), (0, e_pad - E),
                  constant_values=-1).reshape(n_tiles, te)
    if e_pad != E:
        # TODO(synk): for large ragged E this is one extra HBM copy of the
        # dominant stream; feed tile-aligned edge buffers from upstream (or
        # process the <te-row tail separately) to avoid it.
        ef = jnp.pad(edge_feats, ((0, e_pad - E), (0, 0)))
    else:
        ef = edge_feats

    # ---- kernel --------------------------------------------------------------
    def kernel(e_ref, w_ref, b_ref, seg_ref, hpart_ref, wout_ref):
        # Zero this core's resident f32 accumulator on its first tile.
        @pl.when(pl.program_id(1) == 0)
        def _():
            hpart_ref[...] = jnp.zeros_like(hpart_ref)

        e = e_ref[...]                                     # [te, F]
        seg = seg_ref[...]                                 # [1, te] int32

        # Linear(F, 1) as a lane-dense MXU matvec: contract F of w_row with F
        # of e -> [1, te] logits row (dense sigmoid, dense weight store).
        logits = jax.lax.dot_general(
            w_ref[...], e,
            dimension_numbers=(((1,), (1,)), ((), ())),
            preferred_element_type=jnp.float32)            # [1, te] f32
        weights = jax.nn.sigmoid(logits + b_ref[...])      # [1, te] f32

        wout_ref[...] = weights.astype(wout_ref.dtype)     # lane-dense row

        # Weighted one-hot [b_pad, te]: graphs on sublanes, edges on lanes.
        # Padded edges have seg == -1 so their column is all zeros.
        gid = jax.lax.broadcasted_iota(jnp.int32, (b_pad, te), 0)
        w_cast = weights.astype(e.dtype)
        onehot_w = jnp.where(gid == seg, w_cast, jnp.zeros_like(w_cast))

        # Segmented weighted sum as one standard [b_pad, te] @ [te, F] MXU
        # matmul with f32 accumulation.
        part = jax.lax.dot_general(
            onehot_w, e,
            dimension_numbers=(((1,), (0,)), ((), ())),
            preferred_element_type=jnp.float32)            # [b_pad, F]
        hpart_ref[...] += part[None]

    tile_map = lambda c, t: (c * tiles_per_core + t, 0)

    grid_spec = pltpu.PrefetchScalarGridSpec(
        num_scalar_prefetch=0,
        grid=(n_cores, tiles_per_core),
        in_specs=[
            pl.BlockSpec((te, F), tile_map),               # edge-feature tile
            pl.BlockSpec((1, F), lambda c, t: (0, 0)),     # lin_w (resident)
            pl.BlockSpec((1, 1), lambda c, t: (0, 0)),     # lin_b (resident)
            pl.BlockSpec((1, te), tile_map),               # seg ids (lane-dense)
        ],
        out_specs=(
            pl.BlockSpec((1, b_pad, F), lambda c, t: (c, 0, 0)),  # per-core acc
            pl.BlockSpec((1, te), tile_map),               # weights (lane-dense)
        ),
    )

    h_part, w_rows = pl.pallas_call(
        kernel,
        out_shape=(
            jax.ShapeDtypeStruct((n_cores, b_pad, F), jnp.float32),
            jax.ShapeDtypeStruct((n_tiles, te), dt),
        ),
        grid_spec=grid_spec,
        compiler_params=pltpu.CompilerParams(
            # On v7x, switch the first axis to pltpu.CORE_PARALLEL if the
            # profile shows plain "parallel" does not shard across the 2 TCs.
            dimension_semantics=("parallel", "arbitrary"),
            vmem_limit_bytes=32 * 1024 * 1024,
        ),
    )(ef, w_row, bias, sid)

    h_g_sum = h_part.sum(axis=0)[:B].astype(dt)   # tiny (n_cores,B_pad,F) finish
    weights = w_rows.reshape(e_pad, 1)[:E]        # drop padded edge rows
    return h_g_sum, weights


if __name__ == "__main__":
    key = jax.random.PRNGKey(0)
    k_e, k_w, k_b = jax.random.split(key, 3)

    # Small synthetic "batched graph": B graphs, E total edges, F edge features.
    B = 2
    E = 16          # 10 edges in graph 0, 6 edges in graph 1
    F = 32          # in_feats

    edge_feats = jax.random.normal(k_e, (E, F), dtype=jnp.float32)

    # nn.Linear(in_feats, 1): weight [1, F], bias [1], U(-1/sqrt(F), 1/sqrt(F)).
    bound = 1.0 / math.sqrt(F)
    lin_w = jax.random.uniform(k_w, (1, F), minval=-bound, maxval=bound,
                               dtype=jnp.float32)
    lin_b = jax.random.uniform(k_b, (1,), minval=-bound, maxval=bound,
                               dtype=jnp.float32)

    # Edge -> graph segment ids (replaces the DGL batched-graph object).
    seg_ids = jnp.array([0] * 10 + [1] * 6, dtype=jnp.int32)

    h_g_sum, weights = edge_weight_and_sum_v2(
        edge_feats, lin_w, lin_b, seg_ids, num_graphs=B)
    jax.block_until_ready((h_g_sum, weights))

    # Pure-JAX reference check.
    w_ref = jax.nn.sigmoid(edge_feats @ lin_w.T + lin_b)            # [E, 1]
    seg_onehot = jax.nn.one_hot(seg_ids, B, dtype=jnp.float32)      # [E, B]
    h_ref = seg_onehot.T @ (edge_feats * w_ref)                     # [B, F]
    assert jnp.allclose(weights, w_ref, atol=1e-5, rtol=1e-5)
    assert jnp.allclose(h_g_sum, h_ref, atol=1e-5, rtol=1e-5)

    print("KERNEL_OK")
</pallas_src>

<mosaic_0001>
module attributes {stable_mosaic.version = 11 : i64} {
  func.func @kernel(%arg0: i32, %arg1: i32, %arg2: memref<16x32xf32, #tpu.memory_space<vmem>>, %arg3: memref<1x32xf32, #tpu.memory_space<vmem>>, %arg4: memref<1x1xf32, #tpu.memory_space<vmem>>, %arg5: memref<1x16xi32, #tpu.memory_space<vmem>>, %arg6: memref<1x8x32xf32, #tpu.memory_space<vmem>>, %arg7: memref<1x16xf32, #tpu.memory_space<vmem>>) attributes {dimension_semantics = [#tpu.dimension_semantics<parallel>, #tpu.dimension_semantics<arbitrary>], iteration_bounds = array<i64: 1, 1>, scalar_prefetch = 0 : i64, scratch_operands = 0 : i64, tpu.core_type = #tpu.core_type<tc>, window_params = [{transform_indices = @transform_0, window_bounds = array<i64: 16, 32>}, {pipeline_mode = #tpu.pipeline_mode<synchronous>, transform_indices = @transform_1, window_bounds = array<i64: 1, 32>}, {pipeline_mode = #tpu.pipeline_mode<synchronous>, transform_indices = @transform_2, window_bounds = array<i64: 1, 1>}, {transform_indices = @transform_3, window_bounds = array<i64: 1, 16>}, {transform_indices = @transform_4, window_bounds = array<i64: 1, 8, 32>}, {transform_indices = @transform_5, window_bounds = array<i64: 1, 16>}]} {
    %c0_i32 = arith.constant 0 : i32
    %0 = arith.cmpi eq, %arg1, %c0_i32 : i32
    %1 = arith.extui %0 : i1 to i32
    %c0_i32_0 = arith.constant 0 : i32
    %2 = arith.cmpi ne, %1, %c0_i32_0 : i32
    scf.if %2 {
      %cst_19 = arith.constant 0.000000e+00 : f32
      %30 = vector.broadcast %cst_19 : f32 to vector<1x8x32xf32>
      %c0_20 = arith.constant 0 : index
      %c0_21 = arith.constant 0 : index
      %c0_22 = arith.constant 0 : index
      %31 = vector.load %arg6[%c0_20, %c0_21, %c0_22] : memref<1x8x32xf32, #tpu.memory_space<vmem>>, vector<1x8x32xf32>
      tpu.vector_store %arg6[%c0_20, %c0_21, %c0_22], %30 {strides = array<i32>} : memref<1x8x32xf32, #tpu.memory_space<vmem>>, vector<1x8x32xf32>,
    } else {
    }
    %c0 = arith.constant 0 : index
    %c0_1 = arith.constant 0 : index
    %3 = vector.load %arg2[%c0, %c0_1] : memref<16x32xf32, #tpu.memory_space<vmem>>, vector<16x32xf32>
    %c0_2 = arith.constant 0 : index
    %c0_3 = arith.constant 0 : index
    %4 = vector.load %arg5[%c0_2, %c0_3] : memref<1x16xi32, #tpu.memory_space<vmem>>, vector<1x16xi32>
    %c0_4 = arith.constant 0 : index
    %c0_5 = arith.constant 0 : index
    %5 = vector.load %arg3[%c0_4, %c0_5] : memref<1x32xf32, #tpu.memory_space<vmem>>, vector<1x32xf32>
    %cst = arith.constant dense<0.000000e+00> : vector<1x16xf32>
    %6 = tpu.matmul %5, %3, %cst {dimension_numbers = #tpu.dot_dimension_numbers<[1], [1], [0], [0], [0, 0, 1, 0], [], []>} : vector<1x32xf32>, vector<16x32xf32>, vector<1x16xf32> -> vector<1x16xf32>
    %c0_6 = arith.constant 0 : index
    %c0_7 = arith.constant 0 : index
    %7 = vector.load %arg4[%c0_6, %c0_7] : memref<1x1xf32, #tpu.memory_space<vmem>>, vector<1x1xf32>
    %8 = vector.broadcast %7 : vector<1x1xf32> to vector<1x16xf32>
    %9 = arith.addf %6, %8 : vector<1x16xf32>
    %10 = arith.negf %9 : vector<1x16xf32>
    %11 = math.exp %10 : vector<1x16xf32>
    %cst_8 = arith.constant 1.000000e+00 : f32
    %12 = vector.broadcast %cst_8 : f32 to vector<1x16xf32>
    %13 = arith.addf %12, %11 : vector<1x16xf32>
    %14 = arith.divf %12, %13 : vector<1x16xf32>
    %c0_9 = arith.constant 0 : index
    %c0_10 = arith.constant 0 : index
    %15 = vector.load %arg7[%c0_9, %c0_10] : memref<1x16xf32, #tpu.memory_space<vmem>>, vector<1x16xf32>
    tpu.vector_store %arg7[%c0_9, %c0_10], %14 {strides = array<i32>} : memref<1x16xf32, #tpu.memory_space<vmem>>, vector<1x16xf32>,
    %16 = tpu.iota {dimensions = array<i32: 0>} : vector<8x16xi32>
    %17 = vector.broadcast %4 : vector<1x16xi32> to vector<8x16xi32>
    %18 = arith.cmpi eq, %16, %17 : vector<8x16xi32>
    %cst_11 = arith.constant 0.000000e+00 : f32
    %19 = vector.broadcast %cst_11 : f32 to vector<1x16xf32>
    %20 = vector.shape_cast %14 : vector<1x16xf32> to vector<1x16xf32>
    %21 = vector.broadcast %20 : vector<1x16xf32> to vector<8x16xf32>
    %22 = vector.shape_cast %19 : vector<1x16xf32> to vector<1x16xf32>
    %23 = vector.broadcast %22 : vector<1x16xf32> to vector<8x16xf32>
    %24 = arith.select %18, %21, %23 : vector<8x16xi1>, vector<8x16xf32>
    %cst_12 = arith.constant dense<0.000000e+00> : vector<8x32xf32>
    %25 = tpu.matmul %24, %3, %cst_12 {dimension_numbers = #tpu.dot_dimension_numbers<[1], [0], [0], [1], [0, 0, 1, 1], [], []>} : vector<8x16xf32>, vector<16x32xf32>, vector<8x32xf32> -> vector<8x32xf32>
    %c0_13 = arith.constant 0 : index
    %c0_14 = arith.constant 0 : index
    %c0_15 = arith.constant 0 : index
    %26 = vector.load %arg6[%c0_13, %c0_14, %c0_15] : memref<1x8x32xf32, #tpu.memory_space<vmem>>, vector<1x8x32xf32>
    %27 = vector.shape_cast %25 : vector<8x32xf32> to vector<1x8x32xf32>
    %28 = arith.addf %26, %27 : vector<1x8x32xf32>
    %c0_16 = arith.constant 0 : index
    %c0_17 = arith.constant 0 : index
    %c0_18 = arith.constant 0 : index
    %29 = vector.load %arg6[%c0_16, %c0_17, %c0_18] : memref<1x8x32xf32, #tpu.memory_space<vmem>>, vector<1x8x32xf32>
    tpu.vector_store %arg6[%c0_16, %c0_17, %c0_18], %28 {strides = array<i32>} : memref<1x8x32xf32, #tpu.memory_space<vmem>>, vector<1x8x32xf32>,
    return
  }
  func.func @transform_0(%arg0: i32, %arg1: i32) -> (i32, i32) {
    %c1_i32 = arith.constant 1 : i32
    %0 = arith.muli %arg0, %c1_i32 : i32
    %1 = arith.addi %0, %arg1 : i32
    %c0_i32 = arith.constant 0 : i32
    %c0_i32_0 = arith.constant 0 : i32
    return %1, %c0_i32 : i32, i32
  }
  func.func @transform_1(%arg0: i32, %arg1: i32) -> (i32, i32) {
    %c0_i32 = arith.constant 0 : i32
    %c0_i32_0 = arith.constant 0 : i32
    %c0_i32_1 = arith.constant 0 : i32
    return %c0_i32, %c0_i32_0 : i32, i32
  }
  func.func @transform_2(%arg0: i32, %arg1: i32) -> (i32, i32) {
    %c0_i32 = arith.constant 0 : i32
    %c0_i32_0 = arith.constant 0 : i32
    %c0_i32_1 = arith.constant 0 : i32
    return %c0_i32, %c0_i32_0 : i32, i32
  }
  func.func @transform_3(%arg0: i32, %arg1: i32) -> (i32, i32) {
    %c1_i32 = arith.constant 1 : i32
    %0 = arith.muli %arg0, %c1_i32 : i32
    %1 = arith.addi %0, %arg1 : i32
    %c0_i32 = arith.constant 0 : i32
    %c0_i32_0 = arith.constant 0 : i32
    return %1, %c0_i32 : i32, i32
  }
  func.func @transform_4(%arg0: i32, %arg1: i32) -> (i32, i32, i32) {
    %c0_i32 = arith.constant 0 : i32
    %c0_i32_0 = arith.constant 0 : i32
    %c0_i32_1 = arith.constant 0 : i32
    return %arg0, %c0_i32, %c0_i32_0 : i32, i32, i32
  }
  func.func @transform_5(%arg0: i32, %arg1: i32) -> (i32, i32) {
    %c1_i32 = arith.constant 1 : i32
    %0 = arith.muli %arg0, %c1_i32 : i32
    %1 = arith.addi %0, %arg1 : i32
    %c0_i32 = arith.constant 0 : i32
    %c0_i32_0 = arith.constant 0 : i32
    return %1, %c0_i32 : i32, i32
  }
}

</mosaic_0001>

<llo_original>
// kernel: tpu_custom_call.1
$region0: #{tpu_custom_call.1}
  #allocation0 [shape = 'u32[]', space=smem, size = 0x4, offset = 0x4, fixed_abs, tag = 'smem constant byte address 0x4 - core index']
  #allocation1 [shape = 'u32[144,128]{1,0:T(1,128)}', space=vmem, size = 0x12000, scoped, tag = 'internal scratch']
  #allocation2 [shape = 'f32[1,1]{1,0:T(1,128)S(1)}', space=vmem, size = 0x200, scoped, tag = 'scoped memory for tpu_custom_call.1']
  %s0 = inlined_call_operand.hbm [shape: f32[16,32], index: 0, kind: input, shape index: {}]
  %s1 = inlined_call_operand.vmem [shape: f32[1,32], index: 1, kind: input, shape index: {}]
  %s2 = inlined_call_operand.<no memory space> [shape: f32[1,1], index: 2, kind: input, shape index: {}]
  %s3 = inlined_call_operand.vmem [shape: s32[1,16], index: 3, kind: input, shape index: {}]
  %s4 = inlined_call_operand.hbm [shape: f32[1,8,32], index: 4, kind: output, shape index: {0}]
  %s5 = inlined_call_operand.hbm [shape: f32[1,16], index: 5, kind: output, shape index: {1}]
  %6 = xla_tuple %s4, %s5
  %s7 = sld [smem:[#allocation0]]
  $region42: #{tpu_custom_call.1} parent=0
    _
  %s9 = ssub.s32 1, %s7
  %s10 = scalar_select 0, %s9, %s7
  %v11 = vstv %s2
  %12 = vst [vmem:[#allocation2] sm:$0x1] %v11
  $region1: #{tpu_custom_call.1} parent=0
    #allocation3 [shape = 'u8[8192]{0}', space=vmem, size = 0x2000, scoped, tag = 'input window, operand 0, single buffered']
    #allocation4 [shape = 's32[1]{0}', space=sflag, size = 0x4, scoped, tag = 'scoped memory for tpu_custom_call.1']
    #allocation5 [shape = 's32[1]{0}', space=sflag, size = 0x4, scoped, tag = 'scoped memory for tpu_custom_call.1']
    #allocation6 [shape = 'u8[4096]{0}', space=vmem, size = 0x1000, scoped, tag = 'output window, operand 0, single buffered']
    #allocation7 [shape = 'u8[512]{0}', space=vmem, size = 0x400, scoped, tag = 'output window, operand 1, single buffered']
    #allocation8 [shape = 's32[1]{0}', space=sflag, size = 0x4, scoped, tag = 'scoped memory for tpu_custom_call.1']
    %13 = vsyncpa [#allocation4], 0
    %14 = vsyncpa [#allocation5], 0
    %15 = vsyncpa [#allocation8], 0
    // Predicated region
    $region2: #{tpu_custom_call.1} parent=1 // pred_check
      _
    $region3: #{tpu_custom_call.1} parent=1 // pred_check_branch
      %17 = sbr.rel (0) target = $region5
    $region4: #{tpu_custom_call.1} parent=1 // pred_region
      %s18 = sadd.s32 0, 0
      %s19 = smul.u32 2, %s18
      %s21 = ssub.s32 256, 256
      %22 = vsyncadd [#allocation4], %s21
      %s23 = smul.addr %s19, 128
      %s24 = scalar_lea.hbm %s0, %s23
      %s25 = sshll.u32 [#allocation3], 4
      %s26 = int_to_ptr.vmem [resolvable:$true] %s25
      %31 = dma.hbm_to_vmem [thread:$0]  %s24, 256, %s26, [#allocation4], 128, 128, 8
    $region5: #{tpu_custom_call.1} parent=1 // pred_fallthru
      _
    // Predicated region
    $region6: #{tpu_custom_call.1} parent=1 // pred_check
      _
    $region7: #{tpu_custom_call.1} parent=1 // pred_check_branch
      %33 = sbr.rel (0) target = $region9
    $region8: #{tpu_custom_call.1} parent=1 // pred_region
      _
    $region9: #{tpu_custom_call.1} parent=1 // pred_fallthru
      _
    // Predicated region
    $region10: #{tpu_custom_call.1} parent=1 // pred_check
      _
    $region11: #{tpu_custom_call.1} parent=1 // pred_check_branch
      %35 = sbr.rel (0) target = $region13
    $region12: #{tpu_custom_call.1} parent=1 // pred_region
      _
    $region13: #{tpu_custom_call.1} parent=1 // pred_fallthru
      _
    // Predicated region
    $region14: #{tpu_custom_call.1} parent=1 // pred_check
      _
    $region15: #{tpu_custom_call.1} parent=1 // pred_check_branch
      %37 = sbr.rel (0) target = $region17
    $region16: #{tpu_custom_call.1} parent=1 // pred_region
      %s38 = sadd.s32 0, 0
      %p39 = scmp.lt.s32.totalorder %s38, 0
      %s40 = scalar_select %p39, %s38, 0
      %s41 = scalar_lea.vmem %s3, %s40
      %s42 = sadd.s32 0, 0
    $region17: #{tpu_custom_call.1} parent=1 // pred_fallthru
      _
    // Predicated region
    $region18: #{tpu_custom_call.1} parent=1 // pred_check
      _
    $region19: #{tpu_custom_call.1} parent=1 // pred_check_branch
      %44 = sbr.rel (0) target = $region21
    $region20: #{tpu_custom_call.1} parent=1 // pred_region
      %45 = dma.done [#allocation4], 256
    $region21: #{tpu_custom_call.1} parent=1 // pred_fallthru
      _
    %s46 = sadd.s32 0, 0
    %p47 = scmp.lt.s32.totalorder %s46, 0
    %s48 = scalar_select %p47, %s46, 0
    %s49 = scalar_lea.vmem %s3, %s48
    %s50 = sadd.s32 0, 0
    %s51 = smul.u32 2, %s50
    %s52 = sadd.s32 0, 0
    %p53 = scmp.lt.s32.totalorder %s52, 0
    %s54 = scalar_select %p53, %s52, 0
    %s55 = scalar_lea.vmem %s3, %s54
    %s56 = sadd.s32 0, 0
    %s57 = sadd.s32 0, 0
    %p58 = scmp.eq.s32.totalorder 0, 0
    // Predicated region
    $region22: #{tpu_custom_call.1} parent=1 // pred_check
      %p59 = pneg %p58
    $region23: #{tpu_custom_call.1} parent=1 // pred_check_branch
      %61 = sbr.rel (%p59) target = $region25
    $region24: #{tpu_custom_call.1} parent=1 // pred_region
      %vm62 = vcmask 261120
      %63 = vst.msk [vmem:[#allocation6] sm:$0xff] %vm62, 0.0
    $region25: #{tpu_custom_call.1} parent=1 // pred_fallthru
      _
    %v64 = vld [vmem:[#allocation3] sm:$0xff]
    %v65 = vld [vmem:[#allocation3 + $0x8] sm:$0xff]
    %v66 = vld [vmem:[%s55] sm:$0x1]
    %v67 = vld [vmem:[%s1] sm:$0x1]
    %v68 = vld [vmem:[#allocation2] sm:$0x1]
    %70 = vset.pattern.permute.xlu0 0
    %71 = vperm.xlu0 %70, %v68
    %v72 = vpop.permute.xlu0 %71
    %v74 = vlaneseq
    %v75 = vshrl.u32 %v74, 7
    %v76 = vsub.s32 0, %v75
    %v77 = vrot.slane %v72, %v76
    %vm78 = vcmask 261120
    %v80 = vsel %vm78, %v67, 0
    %v83 = vsel %vm78, %v64, 0
    %v86 = vsel %vm78, %v65, 0
    %88 = vmatprep.subr.mxu0 0.0
    %89 = vmatpush1.xpose.msra.mxu0 %v83
    %90 = vmatprep.subr.mxu0 0.0
    %91 = vmatpush1.xpose.msra.mxu0 %v86
    %92 = vmatprep.subr.mxu0 0.0
    %93 = vmatpush1.xpose.msra.mxu0 0.0
    %94 = vmatprep.subr.mxu0 0.0
    %95 = vmatpush1.xpose.msra.mxu0 0.0
    %96 = vmatprep.subr.mxu0 0.0
    %97 = vmatpush1.xpose.msra.mxu0 0.0
    %98 = vmatprep.subr.mxu0 0.0
    %99 = vmatpush1.xpose.msra.mxu0 0.0
    %100 = vmatprep.subr.mxu0 0.0
    %101 = vmatpush1.xpose.msra.mxu0 0.0
    %102 = vmatprep.subr.mxu0 0.0
    %103 = vmatpush1.xpose.msra.mxu0 0.0
    %104 = vmatprep.subr.mxu0 0.0
    %105 = vmatpush1.xpose.msra.mxu0 0.0
    %106 = vmatprep.subr.mxu0 0.0
    %107 = vmatpush1.xpose.msra.mxu0 0.0
    %108 = vmatprep.subr.mxu0 0.0
    %109 = vmatpush1.xpose.msra.mxu0 0.0
    %110 = vmatprep.subr.mxu0 0.0
    %111 = vmatpush1.xpose.msra.mxu0 0.0
    %112 = vmatprep.subr.mxu0 0.0
    %113 = vmatpush1.xpose.msra.mxu0 0.0
    %114 = vmatprep.subr.mxu0 0.0
    %115 = vmatpush1.xpose.msra.mxu0 0.0
    %116 = vmatprep.subr.mxu0 0.0
    %117 = vmatpush1.xpose.msra.mxu0 0.0
    %118 = vmatprep.subr.mxu0 0.0
    %119 = vmatpush1.xpose.msra.mxu0 0.0
    %120 = vmatprep.subr.mxu0 0.0
    %121 = vmatpush1.xpose.msra.mxu0 0.0
    %122 = vmatprep.subr.mxu0 0.0
    %123 = vmatpush1.xpose.msra.mxu0 0.0
    %124 = vmatprep.subr.mxu0 0.0
    %125 = vmatpush1.xpose.msra.mxu0 0.0
    %126 = vmatprep.subr.mxu0 0.0
    %127 = vmatpush1.xpose.msra.mxu0 0.0
    %128 = vmatprep.subr.mxu0 0.0
    %129 = vmatpush1.xpose.msra.mxu0 0.0
    %130 = vmatprep.subr.mxu0 0.0
    %131 = vmatpush1.xpose.msra.mxu0 0.0
    %132 = vmatprep.subr.mxu0 0.0
    %133 = vmatpush1.xpose.msra.mxu0 0.0
    %134 = vmatprep.subr.mxu0 0.0
    %135 = vmatpush1.xpose.msra.mxu0 0.0
    %136 = vmatprep.subr.mxu0 0.0
    %137 = vmatpush1.xpose.msra.mxu0 0.0
    %138 = vmatprep.subr.mxu0 0.0
    %139 = vmatpush1.xpose.msra.mxu0 0.0
    %140 = vmatprep.subr.mxu0 0.0
    %141 = vmatpush1.xpose.msra.mxu0 0.0
    %142 = vmatprep.subr.mxu0 0.0
    %143 = vmatpush1.xpose.msra.mxu0 0.0
    %144 = vmatprep.subr.mxu0 0.0
    %145 = vmatpush1.xpose.msra.mxu0 0.0
    %146 = vmatprep.subr.mxu0 0.0
    %147 = vmatpush1.xpose.msra.mxu0 0.0
    %148 = vmatprep.subr.mxu0 0.0
    %149 = vmatpush1.xpose.msra.mxu0 0.0
    %150 = vmatprep.subr.mxu0 0.0
    %151 = vmatpush1.xpose.msra.mxu0 0.0
    %152 = vmatprep.mubr.f32.mxu0 0.0
    %153 = vmatmul.mubr.f32.gmra.mrb[0].mxu0 %v80
    %v154 = vpop.f32.mrb[0].mxu0
    %v155 = vadd.f32 %v77, %v154
    %v156 = vpop.f32.mrb[0].mxu0
    %157 = vdwg.mxu0
    %v158 = vxor.u32 %v155, 2147483648
    %v159 = vmul.f32 %v158, 1.442695
    %v160 = vpow.pop %v159
    %v161 = vadd.f32 %v160, 1.0
    %v162 = vrcp.pop %v161
    %v163 = vmul.f32 1.0, %v162
    %vm164 = vcmask 122880
    %165 = vst.msk [vmem:[#allocation7] sm:$0x1] %vm164, %v163
    %v166 = vlaneseq
    %v167 = vshrl.u32 %v166, 7
    %v168 = vlaneseq
    %v169 = vshrl.u32 %v168, 7
    %v170 = vsub.s32 0, %v169
    %v171 = vrot.slane %v66, %v170
    %vm172 = vcmp.eq.s32.totalorder %v167, %v171
    %v173 = vlaneseq
    %v174 = vshrl.u32 %v173, 7
    %v175 = vsub.s32 0, %v174
    %v176 = vrot.slane %v163, %v175
    %v177 = vsel %vm172, %v176, 0.0
    %vm178 = vcmask 130048
    %v180 = vsel %vm178, %v177, 0
    %182 = vmatprep.subr.mxu0 0.0
    %183 = vmatpush1.msra.mxu0 %v64
    %184 = vmatprep.subr.mxu0 0.0
    %185 = vmatpush1.msra.mxu0 %v65
    %186 = vmatprep.subr.mxu0 0.0
    %187 = vmatpush1.msra.mxu0 0.0
    %188 = vmatprep.subr.mxu0 0.0
    %189 = vmatpush1.msra.mxu0 0.0
    %190 = vmatprep.subr.mxu0 0.0
    %191 = vmatpush1.msra.mxu0 0.0
    %192 = vmatprep.subr.mxu0 0.0
    %193 = vmatpush1.msra.mxu0 0.0
    %194 = vmatprep.subr.mxu0 0.0
    %195 = vmatpush1.msra.mxu0 0.0
    %196 = vmatprep.subr.mxu0 0.0
    %197 = vmatpush1.msra.mxu0 0.0
    %198 = vmatprep.subr.mxu0 0.0
    %199 = vmatpush1.msra.mxu0 0.0
    %200 = vmatprep.subr.mxu0 0.0
    %201 = vmatpush1.msra.mxu0 0.0
    %202 = vmatprep.subr.mxu0 0.0
    %203 = vmatpush1.msra.mxu0 0.0
    %204 = vmatprep.subr.mxu0 0.0
    %205 = vmatpush1.msra.mxu0 0.0
    %206 = vmatprep.subr.mxu0 0.0
    %207 = vmatpush1.msra.mxu0 0.0
    %208 = vmatprep.subr.mxu0 0.0
    %209 = vmatpush1.msra.mxu0 0.0
    %210 = vmatprep.subr.mxu0 0.0
    %211 = vmatpush1.msra.mxu0 0.0
    %212 = vmatprep.subr.mxu0 0.0
    %213 = vmatpush1.msra.mxu0 0.0
    %214 = vmatprep.subr.mxu0 0.0
    %215 = vmatpush1.msra.mxu0 0.0
    %216 = vmatprep.subr.mxu0 0.0
    %217 = vmatpush1.msra.mxu0 0.0
    %218 = vmatprep.subr.mxu0 0.0
    %219 = vmatpush1.msra.mxu0 0.0
    %220 = vmatprep.subr.mxu0 0.0
    %221 = vmatpush1.msra.mxu0 0.0
    %222 = vmatprep.subr.mxu0 0.0
    %223 = vmatpush1.msra.mxu0 0.0
    %224 = vmatprep.subr.mxu0 0.0
    %225 = vmatpush1.msra.mxu0 0.0
    %226 = vmatprep.subr.mxu0 0.0
    %227 = vmatpush1.msra.mxu0 0.0
    %228 = vmatprep.subr.mxu0 0.0
    %229 = vmatpush1.msra.mxu0 0.0
    %230 = vmatprep.subr.mxu0 0.0
    %231 = vmatpush1.msra.mxu0 0.0
    %232 = vmatprep.subr.mxu0 0.0
    %233 = vmatpush1.msra.mxu0 0.0
    %234 = vmatprep.subr.mxu0 0.0
    %235 = vmatpush1.msra.mxu0 0.0
    %236 = vmatprep.subr.mxu0 0.0
    %237 = vmatpush1.msra.mxu0 0.0
    %238 = vmatprep.subr.mxu0 0.0
    %239 = vmatpush1.msra.mxu0 0.0
    %240 = vmatprep.subr.mxu0 0.0
    %241 = vmatpush1.msra.mxu0 0.0
    %242 = vmatprep.subr.mxu0 0.0
    %243 = vmatpush1.msra.mxu0 0.0
    %244 = vmatprep.subr.mxu0 0.0
    %245 = vmatpush1.msra.mxu0 0.0
    %246 = vmatprep.mubr.f32.mxu0 0.0
    %247 = vmatmul.mubr.f32.gmra.mrb[0].mxu0 %v180
    %v248 = vpop.f32.mrb[0].mxu0
    %v249 = vadd.f32 0.0, %v248
    %v250 = vpop.f32.mrb[0].mxu0
    %251 = vdwg.mxu0
    %v252 = vld [vmem:[#allocation6] sm:$0xff]
    %v253 = vadd.f32 %v252, %v249
    %254 = vst.msk [vmem:[#allocation6] sm:$0xff] %vm78, %v253
    // Predicated region
    $region26: #{tpu_custom_call.1} parent=1 // pred_check
      _
    $region27: #{tpu_custom_call.1} parent=1 // pred_check_branch
      %256 = sbr.rel (0) target = $region29
    $region28: #{tpu_custom_call.1} parent=1 // pred_region
      %s258 = ssub.s32 128, 128
      %259 = vsyncadd [#allocation5], %s258
      %s261 = sshll.u32 [#allocation6], 4
      %s262 = int_to_ptr.vmem [resolvable:$true] %s261
      %264 = dma.vmem_to_hbm [thread:$0]  %s262, 128, %s4, [#allocation5]
    $region29: #{tpu_custom_call.1} parent=1 // pred_fallthru
      _
    // Predicated region
    $region30: #{tpu_custom_call.1} parent=1 // pred_check
      _
    $region31: #{tpu_custom_call.1} parent=1 // pred_check_branch
      %266 = sbr.rel (0) target = $region33
    $region32: #{tpu_custom_call.1} parent=1 // pred_region
      %s267 = sadd.s32 0, 0
      %s269 = ssub.s32 16, 16
      %270 = vsyncadd [#allocation8], %s269
      %s271 = smul.addr %s267, 16
      %s272 = scalar_lea.hbm %s5, %s271
      %s274 = sshll.u32 [#allocation7], 4
      %s275 = int_to_ptr.vmem [resolvable:$true] %s274
      %277 = dma.vmem_to_hbm [thread:$0]  %s275, 16, %s272, [#allocation8]
    $region33: #{tpu_custom_call.1} parent=1 // pred_fallthru
      _
    // Predicated region
    $region34: #{tpu_custom_call.1} parent=1 // pred_check
      _
    $region35: #{tpu_custom_call.1} parent=1 // pred_check_branch
      %279 = sbr.rel (0) target = $region37
    $region36: #{tpu_custom_call.1} parent=1 // pred_region
      %280 = dma.done [#allocation5], 128
    $region37: #{tpu_custom_call.1} parent=1 // pred_fallthru
      _
    // Predicated region
    $region38: #{tpu_custom_call.1} parent=1 // pred_check
      _
    $region39: #{tpu_custom_call.1} parent=1 // pred_check_branch
      %282 = sbr.rel (0) target = $region41
    $region40: #{tpu_custom_call.1} parent=1 // pred_region
      %283 = dma.done [#allocation8], 16
    $region41: #{tpu_custom_call.1} parent=1 // pred_fallthru
      _
    %284 = vsyncpa [#allocation4], 1
    %285 = vsyncpa [#allocation5], 1
    %286 = vsyncpa [#allocation8], 1

</llo_original>
